<compile_context>
chip_gen: v5e
topology: v5e:2x2
jax: 0.10.0
libtpu: 0.0.40
codegen_flags: <defaults>
</compile_context>

<pallas_src>
import functools

import jax
import jax.numpy as jnp
from jax import lax
from jax.experimental import pallas as pl
from jax.experimental.pallas import tpu as pltpu

HIDDEN = 100            # linear1: 1 -> 100
OUT = 2                 # linear2: 100 -> 2
LANE = 128
SUB = 8
H_PAD = 104             # HIDDEN rounded up to a multiple of 8 (incl. bias unit)
N_CHUNK = H_PAD // SUB  # 13 hidden chunks of 8 sublanes


def decoder_kernel(x_ref, w1_ref, b1_ref, w2a_ref, w2b_ref, o_ref):
    # Lane-dense layout, streamed over 128-lane blocks:
    #   x_ref  : (1, TB)             batch on lanes
    #   w1_ref : (N_CHUNK, 8, 128)   layer-1 weight, lane-broadcast, zero-padded
    #   b1_ref : (N_CHUNK, 8, 128)   layer-1 bias (+ constant-1 bias unit)
    #   w2a_ref: (N_CHUNK, 8, 128)   layer-2 column for output 0 (+ b2[0])
    #   w2b_ref: (N_CHUNK, 8, 128)   layer-2 column for output 1 (+ b2[1])
    #   o_ref  : (2, TB)
    n_lane_blocks = x_ref.shape[1] // LANE

    @pl.loop(0, n_lane_blocks)
    def _(j):
        off = pl.multiple_of(j * LANE, LANE)
        x_blk = x_ref[:, pl.ds(off, LANE)]                  # (1, 128)
        x8 = jnp.broadcast_to(x_blk, (SUB, LANE))           # (8, 128)

        def chunk(c, carry):
            acc_a, acc_b = carry
            # Layer 1 (K=1 contraction): pure VPU broadcast multiply-add.
            h = w1_ref[c] * x8 + b1_ref[c]                  # (8, 128)
            # ELU (alpha=1): single EUP exp + VALU subtract + select.
            h = jnp.where(h > 0.0, h, jnp.exp(h) - 1.0)
            # Layer 2: chunked f32 multiply-accumulate (VPU), bit-faithful f32.
            acc_a = acc_a + w2a_ref[c] * h
            acc_b = acc_b + w2b_ref[c] * h
            return acc_a, acc_b

        zero = jnp.zeros((SUB, LANE), jnp.float32)
        acc_a, acc_b = lax.fori_loop(0, N_CHUNK, chunk, (zero, zero),
                                     unroll=True)

        # Final cross-sublane reduction (XLU) -> one lane-dense row per output.
        o_ref[pl.ds(0, 1), pl.ds(off, LANE)] = jnp.sum(acc_a, axis=0, keepdims=True)
        o_ref[pl.ds(1, 1), pl.ds(off, LANE)] = jnp.sum(acc_b, axis=0, keepdims=True)


def _round_up(x, m):
    return (x + m - 1) // m * m


def _prep_plane(v):
    """1-D vector (len <= H_PAD) -> (N_CHUNK, 8, 128): zero-pad + lane-broadcast."""
    v = v.astype(jnp.float32)
    v = jnp.pad(v, (0, H_PAD - v.shape[0]))
    return jnp.broadcast_to(v.reshape(N_CHUNK, SUB, 1), (N_CHUNK, SUB, LANE))


@functools.partial(jax.jit, static_argnames=("tile_b",))
def decoder_forward(x, w1, b1, w2, b2, *, tile_b=8192):
    """x: (B, 1) f32; w1: (1,100); b1: (1,100); w2: (100,2); b2: (1,2) -> (B, 2)."""
    B = x.shape[0]

    # --- batch tiling (lane-dense), adaptive tile size ------------------------
    tile_b = _round_up(max(int(tile_b), LANE), LANE)
    padded_b = _round_up(B, LANE)
    tb = min(tile_b, padded_b)
    if padded_b > LANE and padded_b // tb < 2:
        # Keep at least 2 balanced grid steps so v7x's two TensorCores both
        # get work under dimension_semantics=("parallel",). No-op on v5e/v6e.
        tb = _round_up((padded_b + 1) // 2, LANE)
    padded_b = _round_up(padded_b, tb)

    x_lanes = jnp.pad(x[:, 0], (0, padded_b - B)).reshape(1, padded_b)

    # --- weight prep (pure layout work, outside the kernel) -------------------
    # Hidden slot 100 is a constant-1 "bias unit": w1=0, b1=1 -> h=1, ELU(1)=1,
    # and its layer-2 weights carry b2, folding the output bias into the MAC.
    w1_p = _prep_plane(w1.reshape(HIDDEN))
    b1_p = _prep_plane(jnp.concatenate([b1.reshape(HIDDEN),
                                        jnp.ones((1,), jnp.float32)]))
    b2_flat = b2.reshape(OUT)
    w2a_p = _prep_plane(jnp.concatenate([w2[:, 0], b2_flat[0:1]]))
    w2b_p = _prep_plane(jnp.concatenate([w2[:, 1], b2_flat[1:2]]))

    grid = (padded_b // tb,)
    const_map = lambda i: (0, 0, 0)   # weights stay resident across grid steps

    out_lanes = pl.pallas_call(
        decoder_kernel,
        out_shape=jax.ShapeDtypeStruct((OUT, padded_b), jnp.float32),
        grid=grid,
        in_specs=[
            pl.BlockSpec((1, tb), lambda i: (0, i)),         # x tile (batch on lanes)
            pl.BlockSpec((N_CHUNK, SUB, LANE), const_map),   # w1
            pl.BlockSpec((N_CHUNK, SUB, LANE), const_map),   # b1 (+bias unit)
            pl.BlockSpec((N_CHUNK, SUB, LANE), const_map),   # w2 column 0 (+b2[0])
            pl.BlockSpec((N_CHUNK, SUB, LANE), const_map),   # w2 column 1 (+b2[1])
        ],
        out_specs=pl.BlockSpec((OUT, tb), lambda i: (0, i)),
        compiler_params=pltpu.CompilerParams(
            dimension_semantics=("parallel",),               # 2x on v7x's 2 TCs
        ),
        cost_estimate=pl.CostEstimate(
            flops=700 * padded_b,                    # ~200 L1 + ~100 ELU + ~400 L2 per row
            transcendentals=H_PAD * padded_b,        # one exp per hidden element
            bytes_accessed=12 * padded_b + 4 * 4 * N_CHUNK * SUB * LANE,
        ),
    )(x_lanes, w1_p, b1_p, w2a_p, w2b_p)

    # Back to the PyTorch (B, 2) layout.  For large batches a downstream
    # consumer should take the lane-dense (2, B) slab directly instead of
    # paying this extra HBM round trip.
    return out_lanes[:, :B].T


def init_params(key):
    """Deterministic init mimicking nn.Linear's U(-1/sqrt(fan_in), 1/sqrt(fan_in))."""
    k1, k2, k3, k4 = jax.random.split(key, 4)
    bound1 = 1.0  # 1/sqrt(1)
    w1 = jax.random.uniform(k1, (1, HIDDEN), jnp.float32, -bound1, bound1)
    b1 = jax.random.uniform(k2, (1, HIDDEN), jnp.float32, -bound1, bound1)
    bound2 = 1.0 / jnp.sqrt(float(HIDDEN))
    w2 = jax.random.uniform(k3, (HIDDEN, OUT), jnp.float32, -bound2, bound2)
    b2 = jax.random.uniform(k4, (1, OUT), jnp.float32, -bound2, bound2)
    return w1, b1, w2, b2


def reference_forward(x, w1, b1, w2, b2):
    """Pure-JAX f32 reference (HIGHEST keeps the reference dot in true f32)."""
    h = jnp.dot(x, w1, precision=jax.lax.Precision.HIGHEST) + b1
    h = jnp.where(h > 0, h, jnp.expm1(h))
    return jnp.dot(h, w2, precision=jax.lax.Precision.HIGHEST) + b2


if __name__ == "__main__":
    key = jax.random.PRNGKey(0)
    k_params, k_x, k_x2, k_x3 = jax.random.split(key, 4)

    w1, b1, w2, b2 = init_params(k_params)

    # Small batch of scalar inputs, shape (B, 1) — consistent with Linear(1, 100).
    B = 8
    x = jax.random.normal(k_x, (B, 1), jnp.float32)
    out = jax.block_until_ready(decoder_forward(x, w1, b1, w2, b2))
    ref = reference_forward(x, w1, b1, w2, b2)
    assert out.shape == (B, 2), out.shape
    assert jnp.allclose(out, ref, atol=1e-5, rtol=1e-5), (out, ref)

    # Multi-tile grid path (grid=3, ragged/padded batch).
    B2 = 300
    x2 = jax.random.normal(k_x2, (B2, 1), jnp.float32)
    out2 = jax.block_until_ready(decoder_forward(x2, w1, b1, w2, b2, tile_b=128))
    ref2 = reference_forward(x2, w1, b1, w2, b2)
    assert out2.shape == (B2, 2), out2.shape
    assert jnp.allclose(out2, ref2, atol=1e-5, rtol=1e-5), (out2, ref2)

    # Adaptive-tile path: default tile, split into 2 grid steps, multiple
    # 128-lane blocks per step.
    B3 = 2500
    x3 = jax.random.normal(k_x3, (B3, 1), jnp.float32)
    out3 = jax.block_until_ready(decoder_forward(x3, w1, b1, w2, b2))
    ref3 = reference_forward(x3, w1, b1, w2, b2)
    assert out3.shape == (B3, 2), out3.shape
    assert jnp.allclose(out3, ref3, atol=1e-5, rtol=1e-5), (out3, ref3)

    print("KERNEL_OK")
</pallas_src>

<mosaic_0001>
module attributes {stable_mosaic.version = 11 : i64} {
  func.func @decoder_kernel(%arg0: i32, %arg1: memref<1x128xf32, #tpu.memory_space<vmem>>, %arg2: memref<13x8x128xf32, #tpu.memory_space<vmem>>, %arg3: memref<13x8x128xf32, #tpu.memory_space<vmem>>, %arg4: memref<13x8x128xf32, #tpu.memory_space<vmem>>, %arg5: memref<13x8x128xf32, #tpu.memory_space<vmem>>, %arg6: memref<2x128xf32, #tpu.memory_space<vmem>>) attributes {dimension_semantics = [#tpu.dimension_semantics<parallel>], iteration_bounds = array<i64: 1>, scalar_prefetch = 0 : i64, scratch_operands = 0 : i64, tpu.core_type = #tpu.core_type<tc>, window_params = [{transform_indices = @transform_0, window_bounds = array<i64: 1, 128>}, {pipeline_mode = #tpu.pipeline_mode<synchronous>, transform_indices = @transform_1, window_bounds = array<i64: 13, 8, 128>}, {pipeline_mode = #tpu.pipeline_mode<synchronous>, transform_indices = @transform_2, window_bounds = array<i64: 13, 8, 128>}, {pipeline_mode = #tpu.pipeline_mode<synchronous>, transform_indices = @transform_3, window_bounds = array<i64: 13, 8, 128>}, {pipeline_mode = #tpu.pipeline_mode<synchronous>, transform_indices = @transform_4, window_bounds = array<i64: 13, 8, 128>}, {transform_indices = @transform_5, window_bounds = array<i64: 2, 128>}]} {
    %c0_i32 = arith.constant 0 : i32
    %c1_i32 = arith.constant 1 : i32
    %0 = arith.muli %c0_i32, %c1_i32 : i32
    %c0_i32_0 = arith.constant 0 : i32
    %1 = arith.addi %c0_i32_0, %0 : i32
    %c128_i32 = arith.constant 128 : i32
    %2 = arith.muli %1, %c128_i32 : i32
    %3 = tpu.assume_multiple %2, 128 : i32
    %c0 = arith.constant 0 : index
    %4 = arith.index_cast %3 : i32 to index
    %5 = vector.load %arg1[%c0, %4] : memref<1x128xf32, #tpu.memory_space<vmem>>, vector<1x128xf32>
    %6 = vector.shape_cast %5 : vector<1x128xf32> to vector<1x128xf32>
    %7 = vector.broadcast %6 : vector<1x128xf32> to vector<8x128xf32>
    %cst = arith.constant 0.000000e+00 : f32
    %8 = vector.broadcast %cst : f32 to vector<8x128xf32>
    %c0_i32_1 = arith.constant 0 : i32
    %9 = arith.index_cast %c0_i32_1 : i32 to index
    %c0_2 = arith.constant 0 : index
    %c0_3 = arith.constant 0 : index
    %10 = vector.load %arg2[%9, %c0_2, %c0_3] : memref<13x8x128xf32, #tpu.memory_space<vmem>>, vector<1x8x128xf32>
    %11 = vector.shape_cast %10 : vector<1x8x128xf32> to vector<8x128xf32>
    %12 = arith.mulf %11, %7 : vector<8x128xf32>
    %13 = arith.index_cast %c0_i32_1 : i32 to index
    %c0_4 = arith.constant 0 : index
    %c0_5 = arith.constant 0 : index
    %14 = vector.load %arg3[%13, %c0_4, %c0_5] : memref<13x8x128xf32, #tpu.memory_space<vmem>>, vector<1x8x128xf32>
    %15 = vector.shape_cast %14 : vector<1x8x128xf32> to vector<8x128xf32>
    %16 = arith.addf %12, %15 : vector<8x128xf32>
    %cst_6 = arith.constant 0.000000e+00 : f32
    %17 = vector.broadcast %cst_6 : f32 to vector<8x128xf32>
    %18 = arith.cmpf ogt, %16, %17 : vector<8x128xf32>
    %19 = math.exp %16 : vector<8x128xf32>
    %cst_7 = arith.constant 1.000000e+00 : f32
    %20 = vector.broadcast %cst_7 : f32 to vector<8x128xf32>
    %21 = arith.subf %19, %20 : vector<8x128xf32>
    %22 = arith.select %18, %16, %21 : vector<8x128xi1>, vector<8x128xf32>
    %23 = arith.index_cast %c0_i32_1 : i32 to index
    %c0_8 = arith.constant 0 : index
    %c0_9 = arith.constant 0 : index
    %24 = vector.load %arg4[%23, %c0_8, %c0_9] : memref<13x8x128xf32, #tpu.memory_space<vmem>>, vector<1x8x128xf32>
    %25 = vector.shape_cast %24 : vector<1x8x128xf32> to vector<8x128xf32>
    %26 = arith.mulf %25, %22 : vector<8x128xf32>
    %27 = arith.addf %8, %26 : vector<8x128xf32>
    %28 = arith.index_cast %c0_i32_1 : i32 to index
    %c0_10 = arith.constant 0 : index
    %c0_11 = arith.constant 0 : index
    %29 = vector.load %arg5[%28, %c0_10, %c0_11] : memref<13x8x128xf32, #tpu.memory_space<vmem>>, vector<1x8x128xf32>
    %30 = vector.shape_cast %29 : vector<1x8x128xf32> to vector<8x128xf32>
    %31 = arith.mulf %30, %22 : vector<8x128xf32>
    %32 = arith.addf %8, %31 : vector<8x128xf32>
    %c1_i32_12 = arith.constant 1 : i32
    %33 = arith.index_cast %c1_i32_12 : i32 to index
    %c0_13 = arith.constant 0 : index
    %c0_14 = arith.constant 0 : index
    %34 = vector.load %arg2[%33, %c0_13, %c0_14] : memref<13x8x128xf32, #tpu.memory_space<vmem>>, vector<1x8x128xf32>
    %35 = vector.shape_cast %34 : vector<1x8x128xf32> to vector<8x128xf32>
    %36 = arith.mulf %35, %7 : vector<8x128xf32>
    %37 = arith.index_cast %c1_i32_12 : i32 to index
    %c0_15 = arith.constant 0 : index
    %c0_16 = arith.constant 0 : index
    %38 = vector.load %arg3[%37, %c0_15, %c0_16] : memref<13x8x128xf32, #tpu.memory_space<vmem>>, vector<1x8x128xf32>
    %39 = vector.shape_cast %38 : vector<1x8x128xf32> to vector<8x128xf32>
    %40 = arith.addf %36, %39 : vector<8x128xf32>
    %cst_17 = arith.constant 0.000000e+00 : f32
    %41 = vector.broadcast %cst_17 : f32 to vector<8x128xf32>
    %42 = arith.cmpf ogt, %40, %41 : vector<8x128xf32>
    %43 = math.exp %40 : vector<8x128xf32>
    %cst_18 = arith.constant 1.000000e+00 : f32
    %44 = vector.broadcast %cst_18 : f32 to vector<8x128xf32>
    %45 = arith.subf %43, %44 : vector<8x128xf32>
    %46 = arith.select %42, %40, %45 : vector<8x128xi1>, vector<8x128xf32>
    %47 = arith.index_cast %c1_i32_12 : i32 to index
    %c0_19 = arith.constant 0 : index
    %c0_20 = arith.constant 0 : index
    %48 = vector.load %arg4[%47, %c0_19, %c0_20] : memref<13x8x128xf32, #tpu.memory_space<vmem>>, vector<1x8x128xf32>
    %49 = vector.shape_cast %48 : vector<1x8x128xf32> to vector<8x128xf32>
    %50 = arith.mulf %49, %46 : vector<8x128xf32>
    %51 = arith.addf %27, %50 : vector<8x128xf32>
    %52 = arith.index_cast %c1_i32_12 : i32 to index
    %c0_21 = arith.constant 0 : index
    %c0_22 = arith.constant 0 : index
    %53 = vector.load %arg5[%52, %c0_21, %c0_22] : memref<13x8x128xf32, #tpu.memory_space<vmem>>, vector<1x8x128xf32>
    %54 = vector.shape_cast %53 : vector<1x8x128xf32> to vector<8x128xf32>
    %55 = arith.mulf %54, %46 : vector<8x128xf32>
    %56 = arith.addf %32, %55 : vector<8x128xf32>
    %c2_i32 = arith.constant 2 : i32
    %57 = arith.index_cast %c2_i32 : i32 to index
    %c0_23 = arith.constant 0 : index
    %c0_24 = arith.constant 0 : index
    %58 = vector.load %arg2[%57, %c0_23, %c0_24] : memref<13x8x128xf32, #tpu.memory_space<vmem>>, vector<1x8x128xf32>
    %59 = vector.shape_cast %58 : vector<1x8x128xf32> to vector<8x128xf32>
    %60 = arith.mulf %59, %7 : vector<8x128xf32>
    %61 = arith.index_cast %c2_i32 : i32 to index
    %c0_25 = arith.constant 0 : index
    %c0_26 = arith.constant 0 : index
    %62 = vector.load %arg3[%61, %c0_25, %c0_26] : memref<13x8x128xf32, #tpu.memory_space<vmem>>, vector<1x8x128xf32>
    %63 = vector.shape_cast %62 : vector<1x8x128xf32> to vector<8x128xf32>
    %64 = arith.addf %60, %63 : vector<8x128xf32>
    %cst_27 = arith.constant 0.000000e+00 : f32
    %65 = vector.broadcast %cst_27 : f32 to vector<8x128xf32>
    %66 = arith.cmpf ogt, %64, %65 : vector<8x128xf32>
    %67 = math.exp %64 : vector<8x128xf32>
    %cst_28 = arith.constant 1.000000e+00 : f32
    %68 = vector.broadcast %cst_28 : f32 to vector<8x128xf32>
    %69 = arith.subf %67, %68 : vector<8x128xf32>
    %70 = arith.select %66, %64, %69 : vector<8x128xi1>, vector<8x128xf32>
    %71 = arith.index_cast %c2_i32 : i32 to index
    %c0_29 = arith.constant 0 : index
    %c0_30 = arith.constant 0 : index
    %72 = vector.load %arg4[%71, %c0_29, %c0_30] : memref<13x8x128xf32, #tpu.memory_space<vmem>>, vector<1x8x128xf32>
    %73 = vector.shape_cast %72 : vector<1x8x128xf32> to vector<8x128xf32>
    %74 = arith.mulf %73, %70 : vector<8x128xf32>
    %75 = arith.addf %51, %74 : vector<8x128xf32>
    %76 = arith.index_cast %c2_i32 : i32 to index
    %c0_31 = arith.constant 0 : index
    %c0_32 = arith.constant 0 : index
    %77 = vector.load %arg5[%76, %c0_31, %c0_32] : memref<13x8x128xf32, #tpu.memory_space<vmem>>, vector<1x8x128xf32>
    %78 = vector.shape_cast %77 : vector<1x8x128xf32> to vector<8x128xf32>
    %79 = arith.mulf %78, %70 : vector<8x128xf32>
    %80 = arith.addf %56, %79 : vector<8x128xf32>
    %c3_i32 = arith.constant 3 : i32
    %81 = arith.index_cast %c3_i32 : i32 to index
    %c0_33 = arith.constant 0 : index
    %c0_34 = arith.constant 0 : index
    %82 = vector.load %arg2[%81, %c0_33, %c0_34] : memref<13x8x128xf32, #tpu.memory_space<vmem>>, vector<1x8x128xf32>
    %83 = vector.shape_cast %82 : vector<1x8x128xf32> to vector<8x128xf32>
    %84 = arith.mulf %83, %7 : vector<8x128xf32>
    %85 = arith.index_cast %c3_i32 : i32 to index
    %c0_35 = arith.constant 0 : index
    %c0_36 = arith.constant 0 : index
    %86 = vector.load %arg3[%85, %c0_35, %c0_36] : memref<13x8x128xf32, #tpu.memory_space<vmem>>, vector<1x8x128xf32>
    %87 = vector.shape_cast %86 : vector<1x8x128xf32> to vector<8x128xf32>
    %88 = arith.addf %84, %87 : vector<8x128xf32>
    %cst_37 = arith.constant 0.000000e+00 : f32
    %89 = vector.broadcast %cst_37 : f32 to vector<8x128xf32>
    %90 = arith.cmpf ogt, %88, %89 : vector<8x128xf32>
    %91 = math.exp %88 : vector<8x128xf32>
    %cst_38 = arith.constant 1.000000e+00 : f32
    %92 = vector.broadcast %cst_38 : f32 to vector<8x128xf32>
    %93 = arith.subf %91, %92 : vector<8x128xf32>
    %94 = arith.select %90, %88, %93 : vector<8x128xi1>, vector<8x128xf32>
    %95 = arith.index_cast %c3_i32 : i32 to index
    %c0_39 = arith.constant 0 : index
    %c0_40 = arith.constant 0 : index
    %96 = vector.load %arg4[%95, %c0_39, %c0_40] : memref<13x8x128xf32, #tpu.memory_space<vmem>>, vector<1x8x128xf32>
    %97 = vector.shape_cast %96 : vector<1x8x128xf32> to vector<8x128xf32>
    %98 = arith.mulf %97, %94 : vector<8x128xf32>
    %99 = arith.addf %75, %98 : vector<8x128xf32>
    %100 = arith.index_cast %c3_i32 : i32 to index
    %c0_41 = arith.constant 0 : index
    %c0_42 = arith.constant 0 : index
    %101 = vector.load %arg5[%100, %c0_41, %c0_42] : memref<13x8x128xf32, #tpu.memory_space<vmem>>, vector<1x8x128xf32>
    %102 = vector.shape_cast %101 : vector<1x8x128xf32> to vector<8x128xf32>
    %103 = arith.mulf %102, %94 : vector<8x128xf32>
    %104 = arith.addf %80, %103 : vector<8x128xf32>
    %c4_i32 = arith.constant 4 : i32
    %105 = arith.index_cast %c4_i32 : i32 to index
    %c0_43 = arith.constant 0 : index
    %c0_44 = arith.constant 0 : index
    %106 = vector.load %arg2[%105, %c0_43, %c0_44] : memref<13x8x128xf32, #tpu.memory_space<vmem>>, vector<1x8x128xf32>
    %107 = vector.shape_cast %106 : vector<1x8x128xf32> to vector<8x128xf32>
    %108 = arith.mulf %107, %7 : vector<8x128xf32>
    %109 = arith.index_cast %c4_i32 : i32 to index
    %c0_45 = arith.constant 0 : index
    %c0_46 = arith.constant 0 : index
    %110 = vector.load %arg3[%109, %c0_45, %c0_46] : memref<13x8x128xf32, #tpu.memory_space<vmem>>, vector<1x8x128xf32>
    %111 = vector.shape_cast %110 : vector<1x8x128xf32> to vector<8x128xf32>
    %112 = arith.addf %108, %111 : vector<8x128xf32>
    %cst_47 = arith.constant 0.000000e+00 : f32
    %113 = vector.broadcast %cst_47 : f32 to vector<8x128xf32>
    %114 = arith.cmpf ogt, %112, %113 : vector<8x128xf32>
    %115 = math.exp %112 : vector<8x128xf32>
    %cst_48 = arith.constant 1.000000e+00 : f32
    %116 = vector.broadcast %cst_48 : f32 to vector<8x128xf32>
    %117 = arith.subf %115, %116 : vector<8x128xf32>
    %118 = arith.select %114, %112, %117 : vector<8x128xi1>, vector<8x128xf32>
    %119 = arith.index_cast %c4_i32 : i32 to index
    %c0_49 = arith.constant 0 : index
    %c0_50 = arith.constant 0 : index
    %120 = vector.load %arg4[%119, %c0_49, %c0_50] : memref<13x8x128xf32, #tpu.memory_space<vmem>>, vector<1x8x128xf32>
    %121 = vector.shape_cast %120 : vector<1x8x128xf32> to vector<8x128xf32>
    %122 = arith.mulf %121, %118 : vector<8x128xf32>
    %123 = arith.addf %99, %122 : vector<8x128xf32>
    %124 = arith.index_cast %c4_i32 : i32 to index
    %c0_51 = arith.constant 0 : index
    %c0_52 = arith.constant 0 : index
    %125 = vector.load %arg5[%124, %c0_51, %c0_52] : memref<13x8x128xf32, #tpu.memory_space<vmem>>, vector<1x8x128xf32>
    %126 = vector.shape_cast %125 : vector<1x8x128xf32> to vector<8x128xf32>
    %127 = arith.mulf %126, %118 : vector<8x128xf32>
    %128 = arith.addf %104, %127 : vector<8x128xf32>
    %c5_i32 = arith.constant 5 : i32
    %129 = arith.index_cast %c5_i32 : i32 to index
    %c0_53 = arith.constant 0 : index
    %c0_54 = arith.constant 0 : index
    %130 = vector.load %arg2[%129, %c0_53, %c0_54] : memref<13x8x128xf32, #tpu.memory_space<vmem>>, vector<1x8x128xf32>
    %131 = vector.shape_cast %130 : vector<1x8x128xf32> to vector<8x128xf32>
    %132 = arith.mulf %131, %7 : vector<8x128xf32>
    %133 = arith.index_cast %c5_i32 : i32 to index
    %c0_55 = arith.constant 0 : index
    %c0_56 = arith.constant 0 : index
    %134 = vector.load %arg3[%133, %c0_55, %c0_56] : memref<13x8x128xf32, #tpu.memory_space<vmem>>, vector<1x8x128xf32>
    %135 = vector.shape_cast %134 : vector<1x8x128xf32> to vector<8x128xf32>
    %136 = arith.addf %132, %135 : vector<8x128xf32>
    %cst_57 = arith.constant 0.000000e+00 : f32
    %137 = vector.broadcast %cst_57 : f32 to vector<8x128xf32>
    %138 = arith.cmpf ogt, %136, %137 : vector<8x128xf32>
    %139 = math.exp %136 : vector<8x128xf32>
    %cst_58 = arith.constant 1.000000e+00 : f32
    %140 = vector.broadcast %cst_58 : f32 to vector<8x128xf32>
    %141 = arith.subf %139, %140 : vector<8x128xf32>
    %142 = arith.select %138, %136, %141 : vector<8x128xi1>, vector<8x128xf32>
    %143 = arith.index_cast %c5_i32 : i32 to index
    %c0_59 = arith.constant 0 : index
    %c0_60 = arith.constant 0 : index
    %144 = vector.load %arg4[%143, %c0_59, %c0_60] : memref<13x8x128xf32, #tpu.memory_space<vmem>>, vector<1x8x128xf32>
    %145 = vector.shape_cast %144 : vector<1x8x128xf32> to vector<8x128xf32>
    %146 = arith.mulf %145, %142 : vector<8x128xf32>
    %147 = arith.addf %123, %146 : vector<8x128xf32>
    %148 = arith.index_cast %c5_i32 : i32 to index
    %c0_61 = arith.constant 0 : index
    %c0_62 = arith.constant 0 : index
    %149 = vector.load %arg5[%148, %c0_61, %c0_62] : memref<13x8x128xf32, #tpu.memory_space<vmem>>, vector<1x8x128xf32>
    %150 = vector.shape_cast %149 : vector<1x8x128xf32> to vector<8x128xf32>
    %151 = arith.mulf %150, %142 : vector<8x128xf32>
    %152 = arith.addf %128, %151 : vector<8x128xf32>
    %c6_i32 = arith.constant 6 : i32
    %153 = arith.index_cast %c6_i32 : i32 to index
    %c0_63 = arith.constant 0 : index
    %c0_64 = arith.constant 0 : index
    %154 = vector.load %arg2[%153, %c0_63, %c0_64] : memref<13x8x128xf32, #tpu.memory_space<vmem>>, vector<1x8x128xf32>
    %155 = vector.shape_cast %154 : vector<1x8x128xf32> to vector<8x128xf32>
    %156 = arith.mulf %155, %7 : vector<8x128xf32>
    %157 = arith.index_cast %c6_i32 : i32 to index
    %c0_65 = arith.constant 0 : index
    %c0_66 = arith.constant 0 : index
    %158 = vector.load %arg3[%157, %c0_65, %c0_66] : memref<13x8x128xf32, #tpu.memory_space<vmem>>, vector<1x8x128xf32>
    %159 = vector.shape_cast %158 : vector<1x8x128xf32> to vector<8x128xf32>
    %160 = arith.addf %156, %159 : vector<8x128xf32>
    %cst_67 = arith.constant 0.000000e+00 : f32
    %161 = vector.broadcast %cst_67 : f32 to vector<8x128xf32>
    %162 = arith.cmpf ogt, %160, %161 : vector<8x128xf32>
    %163 = math.exp %160 : vector<8x128xf32>
    %cst_68 = arith.constant 1.000000e+00 : f32
    %164 = vector.broadcast %cst_68 : f32 to vector<8x128xf32>
    %165 = arith.subf %163, %164 : vector<8x128xf32>
    %166 = arith.select %162, %160, %165 : vector<8x128xi1>, vector<8x128xf32>
    %167 = arith.index_cast %c6_i32 : i32 to index
    %c0_69 = arith.constant 0 : index
    %c0_70 = arith.constant 0 : index
    %168 = vector.load %arg4[%167, %c0_69, %c0_70] : memref<13x8x128xf32, #tpu.memory_space<vmem>>, vector<1x8x128xf32>
    %169 = vector.shape_cast %168 : vector<1x8x128xf32> to vector<8x128xf32>
    %170 = arith.mulf %169, %166 : vector<8x128xf32>
    %171 = arith.addf %147, %170 : vector<8x128xf32>
    %172 = arith.index_cast %c6_i32 : i32 to index
    %c0_71 = arith.constant 0 : index
    %c0_72 = arith.constant 0 : index
    %173 = vector.load %arg5[%172, %c0_71, %c0_72] : memref<13x8x128xf32, #tpu.memory_space<vmem>>, vector<1x8x128xf32>
    %174 = vector.shape_cast %173 : vector<1x8x128xf32> to vector<8x128xf32>
    %175 = arith.mulf %174, %166 : vector<8x128xf32>
    %176 = arith.addf %152, %175 : vector<8x128xf32>
    %c7_i32 = arith.constant 7 : i32
    %177 = arith.index_cast %c7_i32 : i32 to index
    %c0_73 = arith.constant 0 : index
    %c0_74 = arith.constant 0 : index
    %178 = vector.load %arg2[%177, %c0_73, %c0_74] : memref<13x8x128xf32, #tpu.memory_space<vmem>>, vector<1x8x128xf32>
    %179 = vector.shape_cast %178 : vector<1x8x128xf32> to vector<8x128xf32>
    %180 = arith.mulf %179, %7 : vector<8x128xf32>
    %181 = arith.index_cast %c7_i32 : i32 to index
    %c0_75 = arith.constant 0 : index
    %c0_76 = arith.constant 0 : index
    %182 = vector.load %arg3[%181, %c0_75, %c0_76] : memref<13x8x128xf32, #tpu.memory_space<vmem>>, vector<1x8x128xf32>
    %183 = vector.shape_cast %182 : vector<1x8x128xf32> to vector<8x128xf32>
    %184 = arith.addf %180, %183 : vector<8x128xf32>
    %cst_77 = arith.constant 0.000000e+00 : f32
    %185 = vector.broadcast %cst_77 : f32 to vector<8x128xf32>
    %186 = arith.cmpf ogt, %184, %185 : vector<8x128xf32>
    %187 = math.exp %184 : vector<8x128xf32>
    %cst_78 = arith.constant 1.000000e+00 : f32
    %188 = vector.broadcast %cst_78 : f32 to vector<8x128xf32>
    %189 = arith.subf %187, %188 : vector<8x128xf32>
    %190 = arith.select %186, %184, %189 : vector<8x128xi1>, vector<8x128xf32>
    %191 = arith.index_cast %c7_i32 : i32 to index
    %c0_79 = arith.constant 0 : index
    %c0_80 = arith.constant 0 : index
    %192 = vector.load %arg4[%191, %c0_79, %c0_80] : memref<13x8x128xf32, #tpu.memory_space<vmem>>, vector<1x8x128xf32>
    %193 = vector.shape_cast %192 : vector<1x8x128xf32> to vector<8x128xf32>
    %194 = arith.mulf %193, %190 : vector<8x128xf32>
    %195 = arith.addf %171, %194 : vector<8x128xf32>
    %196 = arith.index_cast %c7_i32 : i32 to index
    %c0_81 = arith.constant 0 : index
    %c0_82 = arith.constant 0 : index
    %197 = vector.load %arg5[%196, %c0_81, %c0_82] : memref<13x8x128xf32, #tpu.memory_space<vmem>>, vector<1x8x128xf32>
    %198 = vector.shape_cast %197 : vector<1x8x128xf32> to vector<8x128xf32>
    %199 = arith.mulf %198, %190 : vector<8x128xf32>
    %200 = arith.addf %176, %199 : vector<8x128xf32>
    %c8_i32 = arith.constant 8 : i32
    %201 = arith.index_cast %c8_i32 : i32 to index
    %c0_83 = arith.constant 0 : index
    %c0_84 = arith.constant 0 : index
    %202 = vector.load %arg2[%201, %c0_83, %c0_84] : memref<13x8x128xf32, #tpu.memory_space<vmem>>, vector<1x8x128xf32>
    %203 = vector.shape_cast %202 : vector<1x8x128xf32> to vector<8x128xf32>
    %204 = arith.mulf %203, %7 : vector<8x128xf32>
    %205 = arith.index_cast %c8_i32 : i32 to index
    %c0_85 = arith.constant 0 : index
    %c0_86 = arith.constant 0 : index
    %206 = vector.load %arg3[%205, %c0_85, %c0_86] : memref<13x8x128xf32, #tpu.memory_space<vmem>>, vector<1x8x128xf32>
    %207 = vector.shape_cast %206 : vector<1x8x128xf32> to vector<8x128xf32>
    %208 = arith.addf %204, %207 : vector<8x128xf32>
    %cst_87 = arith.constant 0.000000e+00 : f32
    %209 = vector.broadcast %cst_87 : f32 to vector<8x128xf32>
    %210 = arith.cmpf ogt, %208, %209 : vector<8x128xf32>
    %211 = math.exp %208 : vector<8x128xf32>
    %cst_88 = arith.constant 1.000000e+00 : f32
    %212 = vector.broadcast %cst_88 : f32 to vector<8x128xf32>
    %213 = arith.subf %211, %212 : vector<8x128xf32>
    %214 = arith.select %210, %208, %213 : vector<8x128xi1>, vector<8x128xf32>
    %215 = arith.index_cast %c8_i32 : i32 to index
    %c0_89 = arith.constant 0 : index
    %c0_90 = arith.constant 0 : index
    %216 = vector.load %arg4[%215, %c0_89, %c0_90] : memref<13x8x128xf32, #tpu.memory_space<vmem>>, vector<1x8x128xf32>
    %217 = vector.shape_cast %216 : vector<1x8x128xf32> to vector<8x128xf32>
    %218 = arith.mulf %217, %214 : vector<8x128xf32>
    %219 = arith.addf %195, %218 : vector<8x128xf32>
    %220 = arith.index_cast %c8_i32 : i32 to index
    %c0_91 = arith.constant 0 : index
    %c0_92 = arith.constant 0 : index
    %221 = vector.load %arg5[%220, %c0_91, %c0_92] : memref<13x8x128xf32, #tpu.memory_space<vmem>>, vector<1x8x128xf32>
    %222 = vector.shape_cast %221 : vector<1x8x128xf32> to vector<8x128xf32>
    %223 = arith.mulf %222, %214 : vector<8x128xf32>
    %224 = arith.addf %200, %223 : vector<8x128xf32>
    %c9_i32 = arith.constant 9 : i32
    %225 = arith.index_cast %c9_i32 : i32 to index
    %c0_93 = arith.constant 0 : index
    %c0_94 = arith.constant 0 : index
    %226 = vector.load %arg2[%225, %c0_93, %c0_94] : memref<13x8x128xf32, #tpu.memory_space<vmem>>, vector<1x8x128xf32>
    %227 = vector.shape_cast %226 : vector<1x8x128xf32> to vector<8x128xf32>
    %228 = arith.mulf %227, %7 : vector<8x128xf32>
    %229 = arith.index_cast %c9_i32 : i32 to index
    %c0_95 = arith.constant 0 : index
    %c0_96 = arith.constant 0 : index
    %230 = vector.load %arg3[%229, %c0_95, %c0_96] : memref<13x8x128xf32, #tpu.memory_space<vmem>>, vector<1x8x128xf32>
    %231 = vector.shape_cast %230 : vector<1x8x128xf32> to vector<8x128xf32>
    %232 = arith.addf %228, %231 : vector<8x128xf32>
    %cst_97 = arith.constant 0.000000e+00 : f32
    %233 = vector.broadcast %cst_97 : f32 to vector<8x128xf32>
    %234 = arith.cmpf ogt, %232, %233 : vector<8x128xf32>
    %235 = math.exp %232 : vector<8x128xf32>
    %cst_98 = arith.constant 1.000000e+00 : f32
    %236 = vector.broadcast %cst_98 : f32 to vector<8x128xf32>
    %237 = arith.subf %235, %236 : vector<8x128xf32>
    %238 = arith.select %234, %232, %237 : vector<8x128xi1>, vector<8x128xf32>
    %239 = arith.index_cast %c9_i32 : i32 to index
    %c0_99 = arith.constant 0 : index
    %c0_100 = arith.constant 0 : index
    %240 = vector.load %arg4[%239, %c0_99, %c0_100] : memref<13x8x128xf32, #tpu.memory_space<vmem>>, vector<1x8x128xf32>
    %241 = vector.shape_cast %240 : vector<1x8x128xf32> to vector<8x128xf32>
    %242 = arith.mulf %241, %238 : vector<8x128xf32>
    %243 = arith.addf %219, %242 : vector<8x128xf32>
    %244 = arith.index_cast %c9_i32 : i32 to index
    %c0_101 = arith.constant 0 : index
    %c0_102 = arith.constant 0 : index
    %245 = vector.load %arg5[%244, %c0_101, %c0_102] : memref<13x8x128xf32, #tpu.memory_space<vmem>>, vector<1x8x128xf32>
    %246 = vector.shape_cast %245 : vector<1x8x128xf32> to vector<8x128xf32>
    %247 = arith.mulf %246, %238 : vector<8x128xf32>
    %248 = arith.addf %224, %247 : vector<8x128xf32>
    %c10_i32 = arith.constant 10 : i32
    %249 = arith.index_cast %c10_i32 : i32 to index
    %c0_103 = arith.constant 0 : index
    %c0_104 = arith.constant 0 : index
    %250 = vector.load %arg2[%249, %c0_103, %c0_104] : memref<13x8x128xf32, #tpu.memory_space<vmem>>, vector<1x8x128xf32>
    %251 = vector.shape_cast %250 : vector<1x8x128xf32> to vector<8x128xf32>
    %252 = arith.mulf %251, %7 : vector<8x128xf32>
    %253 = arith.index_cast %c10_i32 : i32 to index
    %c0_105 = arith.constant 0 : index
    %c0_106 = arith.constant 0 : index
    %254 = vector.load %arg3[%253, %c0_105, %c0_106] : memref<13x8x128xf32, #tpu.memory_space<vmem>>, vector<1x8x128xf32>
    %255 = vector.shape_cast %254 : vector<1x8x128xf32> to vector<8x128xf32>
    %256 = arith.addf %252, %255 : vector<8x128xf32>
    %cst_107 = arith.constant 0.000000e+00 : f32
    %257 = vector.broadcast %cst_107 : f32 to vector<8x128xf32>
    %258 = arith.cmpf ogt, %256, %257 : vector<8x128xf32>
    %259 = math.exp %256 : vector<8x128xf32>
    %cst_108 = arith.constant 1.000000e+00 : f32
    %260 = vector.broadcast %cst_108 : f32 to vector<8x128xf32>
    %261 = arith.subf %259, %260 : vector<8x128xf32>
    %262 = arith.select %258, %256, %261 : vector<8x128xi1>, vector<8x128xf32>
    %263 = arith.index_cast %c10_i32 : i32 to index
    %c0_109 = arith.constant 0 : index
    %c0_110 = arith.constant 0 : index
    %264 = vector.load %arg4[%263, %c0_109, %c0_110] : memref<13x8x128xf32, #tpu.memory_space<vmem>>, vector<1x8x128xf32>
    %265 = vector.shape_cast %264 : vector<1x8x128xf32> to vector<8x128xf32>
    %266 = arith.mulf %265, %262 : vector<8x128xf32>
    %267 = arith.addf %243, %266 : vector<8x128xf32>
    %268 = arith.index_cast %c10_i32 : i32 to index
    %c0_111 = arith.constant 0 : index
    %c0_112 = arith.constant 0 : index
    %269 = vector.load %arg5[%268, %c0_111, %c0_112] : memref<13x8x128xf32, #tpu.memory_space<vmem>>, vector<1x8x128xf32>
    %270 = vector.shape_cast %269 : vector<1x8x128xf32> to vector<8x128xf32>
    %271 = arith.mulf %270, %262 : vector<8x128xf32>
    %272 = arith.addf %248, %271 : vector<8x128xf32>
    %c11_i32 = arith.constant 11 : i32
    %273 = arith.index_cast %c11_i32 : i32 to index
    %c0_113 = arith.constant 0 : index
    %c0_114 = arith.constant 0 : index
    %274 = vector.load %arg2[%273, %c0_113, %c0_114] : memref<13x8x128xf32, #tpu.memory_space<vmem>>, vector<1x8x128xf32>
    %275 = vector.shape_cast %274 : vector<1x8x128xf32> to vector<8x128xf32>
    %276 = arith.mulf %275, %7 : vector<8x128xf32>
    %277 = arith.index_cast %c11_i32 : i32 to index
    %c0_115 = arith.constant 0 : index
    %c0_116 = arith.constant 0 : index
    %278 = vector.load %arg3[%277, %c0_115, %c0_116] : memref<13x8x128xf32, #tpu.memory_space<vmem>>, vector<1x8x128xf32>
    %279 = vector.shape_cast %278 : vector<1x8x128xf32> to vector<8x128xf32>
    %280 = arith.addf %276, %279 : vector<8x128xf32>
    %cst_117 = arith.constant 0.000000e+00 : f32
    %281 = vector.broadcast %cst_117 : f32 to vector<8x128xf32>
    %282 = arith.cmpf ogt, %280, %281 : vector<8x128xf32>
    %283 = math.exp %280 : vector<8x128xf32>
    %cst_118 = arith.constant 1.000000e+00 : f32
    %284 = vector.broadcast %cst_118 : f32 to vector<8x128xf32>
    %285 = arith.subf %283, %284 : vector<8x128xf32>
    %286 = arith.select %282, %280, %285 : vector<8x128xi1>, vector<8x128xf32>
    %287 = arith.index_cast %c11_i32 : i32 to index
    %c0_119 = arith.constant 0 : index
    %c0_120 = arith.constant 0 : index
    %288 = vector.load %arg4[%287, %c0_119, %c0_120] : memref<13x8x128xf32, #tpu.memory_space<vmem>>, vector<1x8x128xf32>
    %289 = vector.shape_cast %288 : vector<1x8x128xf32> to vector<8x128xf32>
    %290 = arith.mulf %289, %286 : vector<8x128xf32>
    %291 = arith.addf %267, %290 : vector<8x128xf32>
    %292 = arith.index_cast %c11_i32 : i32 to index
    %c0_121 = arith.constant 0 : index
    %c0_122 = arith.constant 0 : index
    %293 = vector.load %arg5[%292, %c0_121, %c0_122] : memref<13x8x128xf32, #tpu.memory_space<vmem>>, vector<1x8x128xf32>
    %294 = vector.shape_cast %293 : vector<1x8x128xf32> to vector<8x128xf32>
    %295 = arith.mulf %294, %286 : vector<8x128xf32>
    %296 = arith.addf %272, %295 : vector<8x128xf32>
    %c12_i32 = arith.constant 12 : i32
    %297 = arith.index_cast %c12_i32 : i32 to index
    %c0_123 = arith.constant 0 : index
    %c0_124 = arith.constant 0 : index
    %298 = vector.load %arg2[%297, %c0_123, %c0_124] : memref<13x8x128xf32, #tpu.memory_space<vmem>>, vector<1x8x128xf32>
    %299 = vector.shape_cast %298 : vector<1x8x128xf32> to vector<8x128xf32>
    %300 = arith.mulf %299, %7 : vector<8x128xf32>
    %301 = arith.index_cast %c12_i32 : i32 to index
    %c0_125 = arith.constant 0 : index
    %c0_126 = arith.constant 0 : index
    %302 = vector.load %arg3[%301, %c0_125, %c0_126] : memref<13x8x128xf32, #tpu.memory_space<vmem>>, vector<1x8x128xf32>
    %303 = vector.shape_cast %302 : vector<1x8x128xf32> to vector<8x128xf32>
    %304 = arith.addf %300, %303 : vector<8x128xf32>
    %cst_127 = arith.constant 0.000000e+00 : f32
    %305 = vector.broadcast %cst_127 : f32 to vector<8x128xf32>
    %306 = arith.cmpf ogt, %304, %305 : vector<8x128xf32>
    %307 = math.exp %304 : vector<8x128xf32>
    %cst_128 = arith.constant 1.000000e+00 : f32
    %308 = vector.broadcast %cst_128 : f32 to vector<8x128xf32>
    %309 = arith.subf %307, %308 : vector<8x128xf32>
    %310 = arith.select %306, %304, %309 : vector<8x128xi1>, vector<8x128xf32>
    %311 = arith.index_cast %c12_i32 : i32 to index
    %c0_129 = arith.constant 0 : index
    %c0_130 = arith.constant 0 : index
    %312 = vector.load %arg4[%311, %c0_129, %c0_130] : memref<13x8x128xf32, #tpu.memory_space<vmem>>, vector<1x8x128xf32>
    %313 = vector.shape_cast %312 : vector<1x8x128xf32> to vector<8x128xf32>
    %314 = arith.mulf %313, %310 : vector<8x128xf32>
    %315 = arith.addf %291, %314 : vector<8x128xf32>
    %316 = arith.index_cast %c12_i32 : i32 to index
    %c0_131 = arith.constant 0 : index
    %c0_132 = arith.constant 0 : index
    %317 = vector.load %arg5[%316, %c0_131, %c0_132] : memref<13x8x128xf32, #tpu.memory_space<vmem>>, vector<1x8x128xf32>
    %318 = vector.shape_cast %317 : vector<1x8x128xf32> to vector<8x128xf32>
    %319 = arith.mulf %318, %310 : vector<8x128xf32>
    %320 = arith.addf %296, %319 : vector<8x128xf32>
    %c13_i32 = arith.constant 13 : i32
    %cst_133 = arith.constant dense<0.000000e+00> : vector<128xf32>
    %321 = vector.multi_reduction <add>, %315, %cst_133 [0] : vector<8x128xf32> to vector<128xf32>
    %322 = vector.shape_cast %321 : vector<128xf32> to vector<1x128xf32>
    %c0_134 = arith.constant 0 : index
    %323 = arith.index_cast %3 : i32 to index
    %324 = vector.load %arg6[%c0_134, %323] : memref<2x128xf32, #tpu.memory_space<vmem>>, vector<1x128xf32>
    tpu.vector_store %arg6[%c0_134, %323], %322 {strides = array<i32>} : memref<2x128xf32, #tpu.memory_space<vmem>>, vector<1x128xf32>,
    %cst_135 = arith.constant dense<0.000000e+00> : vector<128xf32>
    %325 = vector.multi_reduction <add>, %320, %cst_135 [0] : vector<8x128xf32> to vector<128xf32>
    %326 = vector.shape_cast %325 : vector<128xf32> to vector<1x128xf32>
    %c1 = arith.constant 1 : index
    %327 = arith.index_cast %3 : i32 to index
    %328 = vector.load %arg6[%c1, %327] : memref<2x128xf32, #tpu.memory_space<vmem>>, vector<1x128xf32>
    tpu.vector_store %arg6[%c1, %327], %326 {strides = array<i32>} : memref<2x128xf32, #tpu.memory_space<vmem>>, vector<1x128xf32>,
    %c1_i32_136 = arith.constant 1 : i32
    return
  }
  func.func @transform_0(%arg0: i32) -> (i32, i32) {
    %c0_i32 = arith.constant 0 : i32
    %c0_i32_0 = arith.constant 0 : i32
    return %c0_i32, %arg0 : i32, i32
  }
  func.func @transform_1(%arg0: i32) -> (i32, i32, i32) {
    %c0_i32 = arith.constant 0 : i32
    %c0_i32_0 = arith.constant 0 : i32
    %c0_i32_1 = arith.constant 0 : i32
    %c0_i32_2 = arith.constant 0 : i32
    return %c0_i32, %c0_i32_0, %c0_i32_1 : i32, i32, i32
  }
  func.func @transform_2(%arg0: i32) -> (i32, i32, i32) {
    %c0_i32 = arith.constant 0 : i32
    %c0_i32_0 = arith.constant 0 : i32
    %c0_i32_1 = arith.constant 0 : i32
    %c0_i32_2 = arith.constant 0 : i32
    return %c0_i32, %c0_i32_0, %c0_i32_1 : i32, i32, i32
  }
  func.func @transform_3(%arg0: i32) -> (i32, i32, i32) {
    %c0_i32 = arith.constant 0 : i32
    %c0_i32_0 = arith.constant 0 : i32
    %c0_i32_1 = arith.constant 0 : i32
    %c0_i32_2 = arith.constant 0 : i32
    return %c0_i32, %c0_i32_0, %c0_i32_1 : i32, i32, i32
  }
  func.func @transform_4(%arg0: i32) -> (i32, i32, i32) {
    %c0_i32 = arith.constant 0 : i32
    %c0_i32_0 = arith.constant 0 : i32
    %c0_i32_1 = arith.constant 0 : i32
    %c0_i32_2 = arith.constant 0 : i32
    return %c0_i32, %c0_i32_0, %c0_i32_1 : i32, i32, i32
  }
  func.func @transform_5(%arg0: i32) -> (i32, i32) {
    %c0_i32 = arith.constant 0 : i32
    %c0_i32_0 = arith.constant 0 : i32
    return %c0_i32, %arg0 : i32, i32
  }
}

</mosaic_0001>

<llo_original>
// kernel: decoder_forward.1
$region0: #{decoder_forward.1}
  #allocation0 [shape = 'u32[]', space=smem, size = 0x4, offset = 0x4, fixed_abs, tag = 'smem constant byte address 0x4 - core index']
  #allocation1 [shape = 'u32[72,128]{1,0:T(1,128)}', space=vmem, size = 0x9000, scoped, tag = 'internal scratch']
  %s0 = inlined_call_operand.vmem [shape: f32[1,128], index: 0, kind: input, shape index: {}]
  %s1 = inlined_call_operand.vmem [shape: f32[13,8,128], index: 1, kind: input, shape index: {}]
  %s2 = inlined_call_operand.vmem [shape: f32[13,8,128], index: 2, kind: input, shape index: {}]
  %s3 = inlined_call_operand.vmem [shape: f32[13,8,128], index: 3, kind: input, shape index: {}]
  %s4 = inlined_call_operand.vmem [shape: f32[13,8,128], index: 4, kind: input, shape index: {}]
  %s5 = inlined_call_operand.vmem [shape: f32[2,128], index: 5, kind: output, shape index: {}]
  %s6 = sld [smem:[#allocation0]]
  $region30: #{decoder_forward.1} parent=0
    _
  %s8 = ssub.s32 1, %s6
  %s9 = scalar_select 0, %s8, %s6
  // Predicated region
  $region2: #{decoder_forward.1} parent=0 // pred_check
    _
  $region3: #{decoder_forward.1} parent=0 // pred_check_branch
    %11 = sbr.rel (0) target = $region5
  $region4: #{decoder_forward.1} parent=0 // pred_region
    _
  $region5: #{decoder_forward.1} parent=0 // pred_fallthru
    _
  // Predicated region
  $region6: #{decoder_forward.1} parent=0 // pred_check
    _
  $region7: #{decoder_forward.1} parent=0 // pred_check_branch
    %13 = sbr.rel (0) target = $region9
  $region8: #{decoder_forward.1} parent=0 // pred_region
    _
  $region9: #{decoder_forward.1} parent=0 // pred_fallthru
    _
  // Predicated region
  $region10: #{decoder_forward.1} parent=0 // pred_check
    _
  $region11: #{decoder_forward.1} parent=0 // pred_check_branch
    %15 = sbr.rel (0) target = $region13
  $region12: #{decoder_forward.1} parent=0 // pred_region
    _
  $region13: #{decoder_forward.1} parent=0 // pred_fallthru
    _
  // Predicated region
  $region14: #{decoder_forward.1} parent=0 // pred_check
    _
  $region15: #{decoder_forward.1} parent=0 // pred_check_branch
    %17 = sbr.rel (0) target = $region17
  $region16: #{decoder_forward.1} parent=0 // pred_region
    _
  $region17: #{decoder_forward.1} parent=0 // pred_fallthru
    _
  // Predicated region
  $region18: #{decoder_forward.1} parent=0 // pred_check
    _
  $region19: #{decoder_forward.1} parent=0 // pred_check_branch
    %19 = sbr.rel (0) target = $region21
  $region20: #{decoder_forward.1} parent=0 // pred_region
    _
  $region21: #{decoder_forward.1} parent=0 // pred_fallthru
    _
  %v20 = vld [vmem:[%s0] sm:$0x1]
  %v22 = vperm.slane %v20, 0
  %v24 = vld [vmem:[%s1] sm:$0xff]
  %v25 = vmul.f32 %v24, %v22
  %v26 = vld [vmem:[%s2] sm:$0xff]
  %v27 = vadd.f32 %v25, %v26
  %vm28 = vcmp.gt.f32.partialorder %v27, 0.0
  %v29 = vmul.f32 %v27, 1.442695
  %v30 = vpow.pop %v29
  %v31 = vsub.f32 %v30, 1.0
  %v32 = vsel %vm28, %v27, %v31
  %v33 = vld [vmem:[%s3] sm:$0xff]
  %v34 = vmul.f32 %v33, %v32
  %v35 = vadd.f32 %v34, 0.0
  %v36 = vld [vmem:[%s4] sm:$0xff]
  %v37 = vmul.f32 %v36, %v32
  %v38 = vadd.f32 %v37, 0.0
  %s39 = scalar_lea.vmem %s1, 8
  %v40 = vld [vmem:[%s39] sm:$0xff]
  %v41 = vmul.f32 %v40, %v22
  %s42 = scalar_lea.vmem %s2, 8
  %v43 = vld [vmem:[%s42] sm:$0xff]
  %v44 = vadd.f32 %v41, %v43
  %vm45 = vcmp.gt.f32.partialorder %v44, 0.0
  %v46 = vmul.f32 %v44, 1.442695
  %v47 = vpow.pop %v46
  %v48 = vsub.f32 %v47, 1.0
  %v49 = vsel %vm45, %v44, %v48
  %s50 = scalar_lea.vmem %s3, 8
  %v51 = vld [vmem:[%s50] sm:$0xff]
  %v52 = vmul.f32 %v51, %v49
  %v53 = vadd.f32 %v35, %v52
  %s54 = scalar_lea.vmem %s4, 8
  %v55 = vld [vmem:[%s54] sm:$0xff]
  %v56 = vmul.f32 %v55, %v49
  %v57 = vadd.f32 %v38, %v56
  %s58 = scalar_lea.vmem %s1, 16
  %v59 = vld [vmem:[%s58] sm:$0xff]
  %v60 = vmul.f32 %v59, %v22
  %s61 = scalar_lea.vmem %s2, 16
  %v62 = vld [vmem:[%s61] sm:$0xff]
  %v63 = vadd.f32 %v60, %v62
  %vm64 = vcmp.gt.f32.partialorder %v63, 0.0
  %v65 = vmul.f32 %v63, 1.442695
  %v66 = vpow.pop %v65
  %v67 = vsub.f32 %v66, 1.0
  %v68 = vsel %vm64, %v63, %v67
  %s69 = scalar_lea.vmem %s3, 16
  %v70 = vld [vmem:[%s69] sm:$0xff]
  %v71 = vmul.f32 %v70, %v68
  %v72 = vadd.f32 %v53, %v71
  %s73 = scalar_lea.vmem %s4, 16
  %v74 = vld [vmem:[%s73] sm:$0xff]
  %v75 = vmul.f32 %v74, %v68
  %v76 = vadd.f32 %v57, %v75
  %s77 = scalar_lea.vmem %s1, 24
  %v78 = vld [vmem:[%s77] sm:$0xff]
  %v79 = vmul.f32 %v78, %v22
  %s80 = scalar_lea.vmem %s2, 24
  %v81 = vld [vmem:[%s80] sm:$0xff]
  %v82 = vadd.f32 %v79, %v81
  %vm83 = vcmp.gt.f32.partialorder %v82, 0.0
  %v84 = vmul.f32 %v82, 1.442695
  %v85 = vpow.pop %v84
  %v86 = vsub.f32 %v85, 1.0
  %v87 = vsel %vm83, %v82, %v86
  %s88 = scalar_lea.vmem %s3, 24
  %v89 = vld [vmem:[%s88] sm:$0xff]
  %v90 = vmul.f32 %v89, %v87
  %v91 = vadd.f32 %v72, %v90
  %s92 = scalar_lea.vmem %s4, 24
  %v93 = vld [vmem:[%s92] sm:$0xff]
  %v94 = vmul.f32 %v93, %v87
  %v95 = vadd.f32 %v76, %v94
  %s96 = scalar_lea.vmem %s1, 32
  %v97 = vld [vmem:[%s96] sm:$0xff]
  %v98 = vmul.f32 %v97, %v22
  %s99 = scalar_lea.vmem %s2, 32
  %v100 = vld [vmem:[%s99] sm:$0xff]
  %v101 = vadd.f32 %v98, %v100
  %vm102 = vcmp.gt.f32.partialorder %v101, 0.0
  %v103 = vmul.f32 %v101, 1.442695
  %v104 = vpow.pop %v103
  %v105 = vsub.f32 %v104, 1.0
  %v106 = vsel %vm102, %v101, %v105
  %s107 = scalar_lea.vmem %s3, 32
  %v108 = vld [vmem:[%s107] sm:$0xff]
  %v109 = vmul.f32 %v108, %v106
  %v110 = vadd.f32 %v91, %v109
  %s111 = scalar_lea.vmem %s4, 32
  %v112 = vld [vmem:[%s111] sm:$0xff]
  %v113 = vmul.f32 %v112, %v106
  %v114 = vadd.f32 %v95, %v113
  %s115 = scalar_lea.vmem %s1, 40
  %v116 = vld [vmem:[%s115] sm:$0xff]
  %v117 = vmul.f32 %v116, %v22
  %s118 = scalar_lea.vmem %s2, 40
  %v119 = vld [vmem:[%s118] sm:$0xff]
  %v120 = vadd.f32 %v117, %v119
  %vm121 = vcmp.gt.f32.partialorder %v120, 0.0
  %v122 = vmul.f32 %v120, 1.442695
  %v123 = vpow.pop %v122
  %v124 = vsub.f32 %v123, 1.0
  %v125 = vsel %vm121, %v120, %v124
  %s126 = scalar_lea.vmem %s3, 40
  %v127 = vld [vmem:[%s126] sm:$0xff]
  %v128 = vmul.f32 %v127, %v125
  %v129 = vadd.f32 %v110, %v128
  %s130 = scalar_lea.vmem %s4, 40
  %v131 = vld [vmem:[%s130] sm:$0xff]
  %v132 = vmul.f32 %v131, %v125
  %v133 = vadd.f32 %v114, %v132
  %s134 = scalar_lea.vmem %s1, 48
  %v135 = vld [vmem:[%s134] sm:$0xff]
  %v136 = vmul.f32 %v135, %v22
  %s137 = scalar_lea.vmem %s2, 48
  %v138 = vld [vmem:[%s137] sm:$0xff]
  %v139 = vadd.f32 %v136, %v138
  %vm140 = vcmp.gt.f32.partialorder %v139, 0.0
  %v141 = vmul.f32 %v139, 1.442695
  %v142 = vpow.pop %v141
  %v143 = vsub.f32 %v142, 1.0
  %v144 = vsel %vm140, %v139, %v143
  %s145 = scalar_lea.vmem %s3, 48
  %v146 = vld [vmem:[%s145] sm:$0xff]
  %v147 = vmul.f32 %v146, %v144
  %v148 = vadd.f32 %v129, %v147
  %s149 = scalar_lea.vmem %s4, 48
  %v150 = vld [vmem:[%s149] sm:$0xff]
  %v151 = vmul.f32 %v150, %v144
  %v152 = vadd.f32 %v133, %v151
  %s153 = scalar_lea.vmem %s1, 56
  %v154 = vld [vmem:[%s153] sm:$0xff]
  %v155 = vmul.f32 %v154, %v22
  %s156 = scalar_lea.vmem %s2, 56
  %v157 = vld [vmem:[%s156] sm:$0xff]
  %v158 = vadd.f32 %v155, %v157
  %vm159 = vcmp.gt.f32.partialorder %v158, 0.0
  %v160 = vmul.f32 %v158, 1.442695
  %v161 = vpow.pop %v160
  %v162 = vsub.f32 %v161, 1.0
  %v163 = vsel %vm159, %v158, %v162
  %s164 = scalar_lea.vmem %s3, 56
  %v165 = vld [vmem:[%s164] sm:$0xff]
  %v166 = vmul.f32 %v165, %v163
  %v167 = vadd.f32 %v148, %v166
  %s168 = scalar_lea.vmem %s4, 56
  %v169 = vld [vmem:[%s168] sm:$0xff]
  %v170 = vmul.f32 %v169, %v163
  %v171 = vadd.f32 %v152, %v170
  %s172 = scalar_lea.vmem %s1, 64
  %v173 = vld [vmem:[%s172] sm:$0xff]
  %v174 = vmul.f32 %v173, %v22
  %s175 = scalar_lea.vmem %s2, 64
  %v176 = vld [vmem:[%s175] sm:$0xff]
  %v177 = vadd.f32 %v174, %v176
  %vm178 = vcmp.gt.f32.partialorder %v177, 0.0
  %v179 = vmul.f32 %v177, 1.442695
  %v180 = vpow.pop %v179
  %v181 = vsub.f32 %v180, 1.0
  %v182 = vsel %vm178, %v177, %v181
  %s183 = scalar_lea.vmem %s3, 64
  %v184 = vld [vmem:[%s183] sm:$0xff]
  %v185 = vmul.f32 %v184, %v182
  %v186 = vadd.f32 %v167, %v185
  %s187 = scalar_lea.vmem %s4, 64
  %v188 = vld [vmem:[%s187] sm:$0xff]
  %v189 = vmul.f32 %v188, %v182
  %v190 = vadd.f32 %v171, %v189
  %s191 = scalar_lea.vmem %s1, 72
  %v192 = vld [vmem:[%s191] sm:$0xff]
  %v193 = vmul.f32 %v192, %v22
  %s194 = scalar_lea.vmem %s2, 72
  %v195 = vld [vmem:[%s194] sm:$0xff]
  %v196 = vadd.f32 %v193, %v195
  %vm197 = vcmp.gt.f32.partialorder %v196, 0.0
  %v198 = vmul.f32 %v196, 1.442695
  %v199 = vpow.pop %v198
  %v200 = vsub.f32 %v199, 1.0
  %v201 = vsel %vm197, %v196, %v200
  %s202 = scalar_lea.vmem %s3, 72
  %v203 = vld [vmem:[%s202] sm:$0xff]
  %v204 = vmul.f32 %v203, %v201
  %v205 = vadd.f32 %v186, %v204
  %s206 = scalar_lea.vmem %s4, 72
  %v207 = vld [vmem:[%s206] sm:$0xff]
  %v208 = vmul.f32 %v207, %v201
  %v209 = vadd.f32 %v190, %v208
  %s210 = scalar_lea.vmem %s1, 80
  %v211 = vld [vmem:[%s210] sm:$0xff]
  %v212 = vmul.f32 %v211, %v22
  %s213 = scalar_lea.vmem %s2, 80
  %v214 = vld [vmem:[%s213] sm:$0xff]
  %v215 = vadd.f32 %v212, %v214
  %vm216 = vcmp.gt.f32.partialorder %v215, 0.0
  %v217 = vmul.f32 %v215, 1.442695
  %v218 = vpow.pop %v217
  %v219 = vsub.f32 %v218, 1.0
  %v220 = vsel %vm216, %v215, %v219
  %s221 = scalar_lea.vmem %s3, 80
  %v222 = vld [vmem:[%s221] sm:$0xff]
  %v223 = vmul.f32 %v222, %v220
  %v224 = vadd.f32 %v205, %v223
  %s225 = scalar_lea.vmem %s4, 80
  %v226 = vld [vmem:[%s225] sm:$0xff]
  %v227 = vmul.f32 %v226, %v220
  %v228 = vadd.f32 %v209, %v227
  %s229 = scalar_lea.vmem %s1, 88
  %v230 = vld [vmem:[%s229] sm:$0xff]
  %v231 = vmul.f32 %v230, %v22
  %s232 = scalar_lea.vmem %s2, 88
  %v233 = vld [vmem:[%s232] sm:$0xff]
  %v234 = vadd.f32 %v231, %v233
  %vm235 = vcmp.gt.f32.partialorder %v234, 0.0
  %v236 = vmul.f32 %v234, 1.442695
  %v237 = vpow.pop %v236
  %v238 = vsub.f32 %v237, 1.0
  %v239 = vsel %vm235, %v234, %v238
  %s240 = scalar_lea.vmem %s3, 88
  %v241 = vld [vmem:[%s240] sm:$0xff]
  %v242 = vmul.f32 %v241, %v239
  %v243 = vadd.f32 %v224, %v242
  %s244 = scalar_lea.vmem %s4, 88
  %v245 = vld [vmem:[%s244] sm:$0xff]
  %v246 = vmul.f32 %v245, %v239
  %v247 = vadd.f32 %v228, %v246
  %s248 = scalar_lea.vmem %s1, 96
  %v249 = vld [vmem:[%s248] sm:$0xff]
  %v250 = vmul.f32 %v249, %v22
  %s251 = scalar_lea.vmem %s2, 96
  %v252 = vld [vmem:[%s251] sm:$0xff]
  %v253 = vadd.f32 %v250, %v252
  %vm254 = vcmp.gt.f32.partialorder %v253, 0.0
  %v255 = vmul.f32 %v253, 1.442695
  %v256 = vpow.pop %v255
  %v257 = vsub.f32 %v256, 1.0
  %v258 = vsel %vm254, %v253, %v257
  %s259 = scalar_lea.vmem %s3, 96
  %v260 = vld [vmem:[%s259] sm:$0xff]
  %v261 = vmul.f32 %v260, %v258
  %v262 = vadd.f32 %v243, %v261
  %s263 = scalar_lea.vmem %s4, 96
  %v264 = vld [vmem:[%s263] sm:$0xff]
  %v265 = vmul.f32 %v264, %v258
  %v266 = vadd.f32 %v247, %v265
  %v267 = vrot.slane %v262, 4
  %v268 = vadd.f32 %v262, %v267
  %v269 = vrot.slane %v268, 2
  %v270 = vadd.f32 %v268, %v269
  %v271 = vrot.slane %v270, 1
  %v272 = vadd.f32 %v270, %v271
  %273 = vst [vmem:[%s5] sm:$0x1] %v272
  %v274 = vrot.slane %v266, 4
  %v275 = vadd.f32 %v266, %v274
  %v276 = vrot.slane %v275, 2
  %v277 = vadd.f32 %v275, %v276
  %v278 = vrot.slane %v277, 1
  %v279 = vadd.f32 %v277, %v278
  %280 = vst [vmem:[%s5 + $0x1] sm:$0x1] %v279
  // Predicated region
  $region22: #{decoder_forward.1} parent=0 // pred_check
    _
  $region23: #{decoder_forward.1} parent=0 // pred_check_branch
    %282 = sbr.rel (0) target = $region25
  $region24: #{decoder_forward.1} parent=0 // pred_region
    _
  $region25: #{decoder_forward.1} parent=0 // pred_fallthru
    _
  // Predicated region
  $region26: #{decoder_forward.1} parent=0 // pred_check
    _
  $region27: #{decoder_forward.1} parent=0 // pred_check_branch
    %284 = sbr.rel (0) target = $region29
  $region28: #{decoder_forward.1} parent=0 // pred_region
    _
  $region29: #{decoder_forward.1} parent=0 // pred_fallthru
    _

</llo_original>
